<compile_context>
chip_gen: v7x
topology: tpu7x:2x2x1
jax: 0.10.0
libtpu: 0.0.40
codegen_flags: <defaults>
</compile_context>

<pallas_src>
import math

import jax
import jax.numpy as jnp
from jax.experimental import pallas as pl
from jax.experimental.pallas import tpu as pltpu

_MIB = 1024 * 1024


def _round_up(x, m):
    return (x + m - 1) // m * m


def _pick_tile(dim, pref):
    """Largest multiple of 128 <= pref that evenly divides `dim` (dim % 128 == 0)."""
    pref = max(128, pref - pref % 128)
    t = min(pref, dim)
    t -= t % 128
    t = max(t, 128)
    while dim % t != 0:
        t -= 128
    return t


def _pad_dim(dim, pref=512):
    """Pad to a 128-multiple that still admits a reasonably large tile.

    Padding straight to 128 can leave awkward sizes (e.g. 640) whose only
    dividing tile is 128 (~2x roofline penalty); bump those to a 256-multiple
    so tiles of >=256 always exist."""
    p = _round_up(dim, 128)
    if p > 256 and _pick_tile(p, pref) == 128:
        p = _round_up(dim, 256)
    return p


def _vmem_budget_bytes():
    """Generation-aware scoped-VMEM budget.

    v5e/v6e: 128 MiB physical -> ~108 MiB budget.  v7x: 64 MiB per TensorCore
    -> ~54 MiB budget.  Falls back to the conservative 54 MiB if the hardware
    query is unavailable."""
    try:
        cap = int(pltpu.get_tpu_info().vmem_capacity_bytes)
    except Exception:
        cap = 64 * _MIB
    return max(32 * _MIB, min(int(cap * 0.85), cap - 8 * _MIB))


# --------------------------- kernel bodies ----------------------------------
# Single K-step: no accumulator, no pl.when.
def _mm_single_kernel(a_ref, b_ref, out_ref):
    out_ref[...] = jnp.dot(a_ref[...], b_ref[...],
                           preferred_element_type=jnp.float32).astype(out_ref.dtype)


def _mm_single_bias_kernel(a_ref, b_ref, bias_ref, out_ref):
    acc = jnp.dot(a_ref[...], b_ref[...], preferred_element_type=jnp.float32)
    out_ref[...] = (acc + bias_ref[...]).astype(out_ref.dtype)


# Multi K-step, f32 output: accumulate directly into out_ref.  Its block index
# ignores k, so the tile stays resident in VMEM across the reduction; no
# scratch and no extra full-tile vld+vst at finalize.
def _mm_inplace_kernel(a_ref, b_ref, out_ref):
    @pl.when(pl.program_id(2) == 0)
    def _():
        out_ref[...] = jnp.zeros_like(out_ref)

    out_ref[...] += jnp.dot(a_ref[...], b_ref[...],
                            preferred_element_type=jnp.float32)


def _mm_inplace_bias_kernel(a_ref, b_ref, bias_ref, out_ref):
    @pl.when(pl.program_id(2) == 0)
    def _():
        out_ref[...] = jnp.zeros_like(out_ref)

    out_ref[...] += jnp.dot(a_ref[...], b_ref[...],
                            preferred_element_type=jnp.float32)

    @pl.when(pl.program_id(2) == pl.num_programs(2) - 1)
    def _():
        out_ref[...] += bias_ref[...]


# Multi K-step, non-f32 output: f32 VMEM accumulator, cast on the last k step.
def _mm_acc_kernel(a_ref, b_ref, out_ref, acc_ref):
    k = pl.program_id(2)

    @pl.when(k == 0)
    def _():
        acc_ref[...] = jnp.zeros_like(acc_ref)

    acc_ref[...] += jnp.dot(a_ref[...], b_ref[...],
                            preferred_element_type=jnp.float32)

    @pl.when(k == pl.num_programs(2) - 1)
    def _():
        out_ref[...] = acc_ref[...].astype(out_ref.dtype)


def _mm_acc_bias_kernel(a_ref, b_ref, bias_ref, out_ref, acc_ref):
    k = pl.program_id(2)

    @pl.when(k == 0)
    def _():
        acc_ref[...] = jnp.zeros_like(acc_ref)

    acc_ref[...] += jnp.dot(a_ref[...], b_ref[...],
                            preferred_element_type=jnp.float32)

    @pl.when(k == pl.num_programs(2) - 1)
    def _():
        out_ref[...] = (acc_ref[...] + bias_ref[...]).astype(out_ref.dtype)


# --------------------------- tiled matmul wrapper ----------------------------
def _tiled_matmul(a, b, bias=None, *, tm=512, tn=512, tk=1024,
                  out_dtype=jnp.float32, vmem_budget=None,
                  split_for_megacore=True):
    """out = a @ b (+ bias).  All dims must be multiples of 128."""
    m, k_dim = a.shape
    k_dim2, n = b.shape
    assert k_dim == k_dim2
    assert m % 128 == 0 and n % 128 == 0 and k_dim % 128 == 0

    if vmem_budget is None:
        vmem_budget = _vmem_budget_bytes()

    out_is_f32 = jnp.dtype(out_dtype) == jnp.dtype(jnp.float32)
    in_item_a = jnp.dtype(a.dtype).itemsize
    in_item_b = jnp.dtype(b.dtype).itemsize
    out_item = jnp.dtype(out_dtype).itemsize

    tm = _pick_tile(m, tm)
    tn = _pick_tile(n, tn)
    tk = _pick_tile(k_dim, tk)

    # v7x has 2 TensorCores: make sure at least one "parallel" axis has >=2
    # tiles so both cores get output work (measured ~neutral on v5e/v6e).
    if split_for_megacore and m // tm == 1 and n // tn == 1 and m >= 256:
        tm = _pick_tile(m, tm // 2)

    # Shrink tiles until the double-buffered working set fits the VMEM budget.
    def _est(tm_, tn_, tk_):
        byt = 2 * (tm_ * tk_ * in_item_a + tk_ * tn_ * in_item_b)  # A, B bufs
        byt += 2 * tm_ * tn_ * out_item                            # out bufs
        if k_dim // tk_ > 1 and not out_is_f32:
            byt += tm_ * tn_ * 4                                   # f32 acc
        if bias is not None:
            byt += 2 * tn_ * 4
        return byt

    while _est(tm, tn, tk) > int(0.9 * vmem_budget) and max(tm, tn, tk) > 128:
        if tk >= tm and tk >= tn and tk > 128:
            tk = _pick_tile(k_dim, tk // 2)
        elif tm >= tn and tm > 128:
            tm = _pick_tile(m, tm // 2)
        else:
            tn = _pick_tile(n, tn // 2)

    grid = (m // tm, n // tn, k_dim // tk)
    k_steps = grid[2]

    in_specs = [
        pl.BlockSpec((tm, tk), lambda i, j, k: (i, k)),   # A tile
        pl.BlockSpec((tk, tn), lambda i, j, k: (k, j)),   # B tile
    ]
    operands = [a, b]
    if bias is not None:
        in_specs.append(pl.BlockSpec((1, tn), lambda i, j, k: (0, j)))
        operands.append(bias)

    scratch_shapes = []
    if k_steps == 1:
        kernel = _mm_single_bias_kernel if bias is not None else _mm_single_kernel
    elif out_is_f32:
        kernel = _mm_inplace_bias_kernel if bias is not None else _mm_inplace_kernel
    else:
        kernel = _mm_acc_bias_kernel if bias is not None else _mm_acc_kernel
        scratch_shapes = [pltpu.VMEM((tm, tn), jnp.float32)]

    # Truthful HBM traffic: A is streamed once per output column-tile, B once
    # per output row-tile, the output exactly once.
    cost = pl.CostEstimate(
        flops=2 * m * n * k_dim,
        transcendentals=0,
        bytes_accessed=(m * k_dim * in_item_a) * grid[1]
        + (k_dim * n * in_item_b) * grid[0]
        + m * n * out_item
        + (n * 4 if bias is not None else 0),
    )

    return pl.pallas_call(
        kernel,
        out_shape=jax.ShapeDtypeStruct((m, n), out_dtype),
        grid_spec=pltpu.PrefetchScalarGridSpec(
            num_scalar_prefetch=0,
            grid=grid,
            in_specs=in_specs,
            out_specs=pl.BlockSpec((tm, tn), lambda i, j, k: (i, j)),
            scratch_shapes=scratch_shapes,
        ),
        compiler_params=pltpu.CompilerParams(
            # i, j are independent output tiles -> parallel (megacore
            # shardable); k is the reduction carried in VMEM -> arbitrary.
            dimension_semantics=("parallel", "parallel", "arbitrary"),
            vmem_limit_bytes=int(vmem_budget),
        ),
        cost_estimate=cost,
    )(*operands)


# --------------------------- GCN forward -------------------------------------
def _cast_pad(x, dtype, shape):
    """Cast + zero-pad in one XLA op; skipped entirely when already aligned."""
    pr = shape[0] - x.shape[0]
    pc = shape[1] - x.shape[1]
    if pr == 0 and pc == 0 and x.dtype == jnp.dtype(dtype):
        return x
    return jnp.pad(x.astype(dtype), ((0, pr), (0, pc)))


def graph_convolution(adjacency, input_feature, weight, bias=None, *,
                      compute_dtype=jnp.bfloat16):
    """GCN forward: adjacency @ (input_feature @ weight) + bias  (f32 output).

    MXU operands default to bfloat16 with f32 accumulation (native MXU rate,
    half the HBM bytes on the N^2 adjacency stream).  Pass
    compute_dtype=jnp.float32 for numerics closer to the f32 PyTorch reference.
    """
    n, din = input_feature.shape
    dout = weight.shape[1]
    assert adjacency.shape == (n, n)
    assert weight.shape == (din, dout)

    budget = _vmem_budget_bytes()
    # Generation-aware tile preferences: bigger on v5e/v6e (128 MiB VMEM),
    # conservative on v7x (64 MiB per TensorCore).
    if budget >= 96 * _MIB:
        tm_pref, tk_pref = 1024, 2048
    else:
        tm_pref, tk_pref = 512, 1024

    n_p = _pad_dim(n, tm_pref)
    din_p = _pad_dim(din, tk_pref)
    dout_p = _pad_dim(dout, 512)

    a_p = _cast_pad(adjacency, compute_dtype, (n_p, n_p))
    x_p = _cast_pad(input_feature, compute_dtype, (n_p, din_p))
    w_p = _cast_pad(weight, compute_dtype, (din_p, dout_p))

    tn = min(dout_p, 512)

    # Pass 1: support = X @ W, computed exactly once.  Din/Dout are small in
    # GCNs: take the full K in a single step (no accumulator, no pl.when), keep
    # W fully resident, stream X once over a 1-D row grid.
    support = _tiled_matmul(x_p, w_p, tm=tm_pref, tn=tn, tk=din_p,
                            out_dtype=compute_dtype, vmem_budget=budget)

    # Pass 2: out = A @ support (+ bias).  tn = Dout_p means the dominant N^2
    # adjacency stream is DMA'd exactly once; the f32 output accumulates
    # directly into the resident output tile (no scratch); bias only on last k.
    bias_p = None
    if bias is not None:
        bias_p = _cast_pad(bias.reshape(1, dout).astype(jnp.float32),
                           jnp.float32, (1, dout_p))
    out_p = _tiled_matmul(a_p, support, bias_p, tm=tm_pref, tn=tn, tk=tk_pref,
                          out_dtype=jnp.float32, vmem_budget=budget)

    return out_p[:n, :dout]


def init_params(key, input_dim, output_dim, use_bias=True):
    """Deterministic params mirroring reset_parameters():
    kaiming_uniform_ on weight (torch fan_in = weight.size(1) = output_dim),
    zeros for bias."""
    gain = math.sqrt(2.0)                    # leaky_relu with a=0 default
    fan_in = output_dim
    bound = gain * math.sqrt(3.0 / fan_in)
    weight = jax.random.uniform(
        key, (input_dim, output_dim), jnp.float32, minval=-bound, maxval=bound)
    bias = jnp.zeros((output_dim,), jnp.float32) if use_bias else None
    return weight, bias


if __name__ == "__main__":
    # Small shapes: N nodes = 16, input_dim = 8, output_dim = 32
    N, DIN, DOUT = 16, 8, 32

    key = jax.random.PRNGKey(0)
    k_adj, k_x, k_w = jax.random.split(key, 3)

    adjacency = jax.random.uniform(k_adj, (N, N), jnp.float32)
    input_feature = jax.random.normal(k_x, (N, DIN), jnp.float32)
    weight, bias = init_params(k_w, DIN, DOUT, use_bias=True)

    # Plain-JAX f32 reference.
    ref = adjacency @ (input_feature @ weight) + bias[None, :]

    # Default path: bf16 MXU operands, f32 accumulation and output.
    out_bf16 = jax.block_until_ready(
        graph_convolution(adjacency, input_feature, weight, bias))
    assert out_bf16.shape == (N, DOUT)
    assert out_bf16.dtype == jnp.float32
    assert jnp.allclose(out_bf16, ref, atol=5e-2, rtol=5e-2)

    # f32 operand path (closer numerics to the PyTorch reference).
    out_f32 = jax.block_until_ready(
        graph_convolution(adjacency, input_feature, weight, bias,
                          compute_dtype=jnp.float32))
    assert jnp.allclose(out_f32, ref, atol=1e-4, rtol=1e-4)

    # Exercise the multi-K, f32-output path (in-place accumulation into the
    # resident output tile, bias added only on the last K step).
    M2, K2, N2 = 512, 512, 256
    a2 = jax.random.normal(jax.random.PRNGKey(1), (M2, K2), jnp.float32)
    b2 = jax.random.normal(jax.random.PRNGKey(2), (K2, N2), jnp.float32)
    bias2 = jax.random.normal(jax.random.PRNGKey(3), (1, N2), jnp.float32)
    out2 = jax.block_until_ready(
        _tiled_matmul(a2, b2, bias2, tm=256, tn=256, tk=256,
                      out_dtype=jnp.float32))
    assert jnp.allclose(out2, a2 @ b2 + bias2, atol=2e-2, rtol=2e-2)

    # Exercise the multi-K, bf16-output path (f32 VMEM accumulator scratch).
    a3 = a2.astype(jnp.bfloat16)
    b3 = b2.astype(jnp.bfloat16)
    out3 = jax.block_until_ready(
        _tiled_matmul(a3, b3, tm=128, tn=128, tk=256,
                      out_dtype=jnp.bfloat16))
    ref3 = jnp.dot(a3, b3, preferred_element_type=jnp.float32)
    assert jnp.allclose(out3.astype(jnp.float32), ref3, atol=0.5, rtol=5e-2)

    print("KERNEL_OK")
</pallas_src>

<mosaic_0001>
module attributes {stable_mosaic.version = 11 : i64} {
  func.func @_mm_single_kernel(%arg0: i32, %arg1: i32, %arg2: i32, %arg3: memref<128x128xbf16, #tpu.memory_space<vmem>>, %arg4: memref<128x128xbf16, #tpu.memory_space<vmem>>, %arg5: memref<128x128xbf16, #tpu.memory_space<vmem>>) attributes {dimension_semantics = [#tpu.dimension_semantics<parallel>, #tpu.dimension_semantics<parallel>, #tpu.dimension_semantics<arbitrary>], iteration_bounds = array<i64: 1, 1, 1>, scalar_prefetch = 0 : i64, scratch_operands = 0 : i64, tpu.core_type = #tpu.core_type<tc>, window_params = [{transform_indices = @transform_0, window_bounds = array<i64: 128, 128>}, {transform_indices = @transform_1, window_bounds = array<i64: 128, 128>}, {transform_indices = @transform_2, window_bounds = array<i64: 128, 128>}]} {
    %c0 = arith.constant 0 : index
    %c0_0 = arith.constant 0 : index
    %0 = vector.load %arg3[%c0, %c0_0] : memref<128x128xbf16, #tpu.memory_space<vmem>>, vector<128x128xbf16>
    %c0_1 = arith.constant 0 : index
    %c0_2 = arith.constant 0 : index
    %1 = vector.load %arg4[%c0_1, %c0_2] : memref<128x128xbf16, #tpu.memory_space<vmem>>, vector<128x128xbf16>
    %cst = arith.constant dense<0.000000e+00> : vector<128x128xf32>
    %2 = tpu.matmul %0, %1, %cst {dimension_numbers = #tpu.dot_dimension_numbers<[1], [0], [0], [1], [0, 0, 1, 1], [], []>} : vector<128x128xbf16>, vector<128x128xbf16>, vector<128x128xf32> -> vector<128x128xf32>
    %3 = arith.truncf %2 : vector<128x128xf32> to vector<128x128xbf16>
    %c0_3 = arith.constant 0 : index
    %c0_4 = arith.constant 0 : index
    %4 = vector.load %arg5[%c0_3, %c0_4] : memref<128x128xbf16, #tpu.memory_space<vmem>>, vector<128x128xbf16>
    tpu.vector_store %arg5[%c0_3, %c0_4], %3 {strides = array<i32>} : memref<128x128xbf16, #tpu.memory_space<vmem>>, vector<128x128xbf16>,
    return
  }
  func.func @transform_0(%arg0: i32, %arg1: i32, %arg2: i32) -> (i32, i32) {
    %c0_i32 = arith.constant 0 : i32
    return %arg0, %arg2 : i32, i32
  }
  func.func @transform_1(%arg0: i32, %arg1: i32, %arg2: i32) -> (i32, i32) {
    %c0_i32 = arith.constant 0 : i32
    return %arg2, %arg1 : i32, i32
  }
  func.func @transform_2(%arg0: i32, %arg1: i32, %arg2: i32) -> (i32, i32) {
    %c0_i32 = arith.constant 0 : i32
    return %arg0, %arg1 : i32, i32
  }
}

</mosaic_0001>

<llo_original>
// kernel: tpu_custom_call.1
$region0: #{tpu_custom_call.1}
  #allocation0 [shape = 'u32[]', space=smem, size = 0x4, offset = 0x4, fixed_abs, tag = 'smem constant byte address 0x4 - core index']
  #allocation1 [shape = 'u32[144,128]{1,0:T(1,128)}', space=vmem, size = 0x12000, scoped, tag = 'internal scratch']
  %s0 = inlined_call_operand.hbm [shape: bf16[128,128], index: 0, kind: input, shape index: {}]
  %s1 = inlined_call_operand.hbm [shape: bf16[128,128], index: 1, kind: input, shape index: {}]
  %s2 = inlined_call_operand.hbm [shape: bf16[128,128], index: 2, kind: output, shape index: {}]
  %s3 = sld [smem:[#allocation0]]
  $region26: #{tpu_custom_call.1} parent=0
    _
  %s5 = ssub.s32 1, %s3
  %s6 = scalar_select 0, %s5, %s3
  $region1: #{tpu_custom_call.1} parent=0
    #allocation2 [shape = 'u8[32768]{0}', space=vmem, size = 0x8000, scoped, tag = 'input window, operand 0, single buffered']
    #allocation3 [shape = 's32[1]{0}', space=sflag, size = 0x4, scoped, tag = 'scoped memory for tpu_custom_call.1']
    #allocation4 [shape = 's32[1]{0}', space=sflag, size = 0x4, scoped, tag = 'scoped memory for tpu_custom_call.1']
    #allocation5 [shape = 'u8[32768]{0}', space=vmem, size = 0x8000, scoped, tag = 'input window, operand 1, single buffered']
    #allocation6 [shape = 's32[1]{0}', space=sflag, size = 0x4, scoped, tag = 'scoped memory for tpu_custom_call.1']
    #allocation7 [shape = 'u8[32768]{0}', space=vmem, size = 0x8000, scoped, tag = 'output window, operand 0, single buffered']
    %7 = vsyncpa [#allocation3], 0
    %8 = vsyncpa [#allocation6], 0
    %9 = vsyncpa [#allocation4], 0
    // Predicated region
    $region2: #{tpu_custom_call.1} parent=1 // pred_check
      _
    $region3: #{tpu_custom_call.1} parent=1 // pred_check_branch
      %11 = sbr.rel (0) target = $region5
    $region4: #{tpu_custom_call.1} parent=1 // pred_region
      %s13 = ssub.s32 1024, 1024
      %14 = vsyncadd [#allocation3], %s13
      %s15 = sshll.u32 [#allocation2], 4
      %s16 = int_to_ptr.vmem [resolvable:$true] %s15
      %21 = dma.hbm_to_vmem [thread:$0]  %s0, 1024, %s16, [#allocation3], 64, 64, 4
    $region5: #{tpu_custom_call.1} parent=1 // pred_fallthru
      _
    // Predicated region
    $region6: #{tpu_custom_call.1} parent=1 // pred_check
      _
    $region7: #{tpu_custom_call.1} parent=1 // pred_check_branch
      %23 = sbr.rel (0) target = $region9
    $region8: #{tpu_custom_call.1} parent=1 // pred_region
      %s25 = ssub.s32 1024, 1024
      %26 = vsyncadd [#allocation6], %s25
      %s27 = sshll.u32 [#allocation5], 4
      %s28 = int_to_ptr.vmem [resolvable:$true] %s27
      %33 = dma.hbm_to_vmem [thread:$0]  %s1, 1024, %s28, [#allocation6], 64, 64, 4
    $region9: #{tpu_custom_call.1} parent=1 // pred_fallthru
      _
    // Predicated region
    $region10: #{tpu_custom_call.1} parent=1 // pred_check
      _
    $region11: #{tpu_custom_call.1} parent=1 // pred_check_branch
      %35 = sbr.rel (0) target = $region13
    $region12: #{tpu_custom_call.1} parent=1 // pred_region
      %36 = dma.done [#allocation3], 1024
    $region13: #{tpu_custom_call.1} parent=1 // pred_fallthru
      _
    // Predicated region
    $region14: #{tpu_custom_call.1} parent=1 // pred_check
      _
    $region15: #{tpu_custom_call.1} parent=1 // pred_check_branch
      %38 = sbr.rel (0) target = $region17
    $region16: #{tpu_custom_call.1} parent=1 // pred_region
      %39 = dma.done [#allocation6], 1024
    $region17: #{tpu_custom_call.1} parent=1 // pred_fallthru
      _
    %v41 = vld [vmem:[#allocation2] sm:$0xf]
    %v42 = vld [vmem:[#allocation2 + $0x4] sm:$0xf]
    %v43 = vld [vmem:[#allocation2 + $0x8] sm:$0xf]
    %v44 = vld [vmem:[#allocation2 + $0xc] sm:$0xf]
    %v45 = vld [vmem:[#allocation2 + $0x10] sm:$0xf]
    %v46 = vld [vmem:[#allocation2 + $0x14] sm:$0xf]
    %v47 = vld [vmem:[#allocation2 + $0x18] sm:$0xf]
    %v48 = vld [vmem:[#allocation2 + $0x1c] sm:$0xf]
    %v49 = vld [vmem:[#allocation2 + $0x20] sm:$0xf]
    %v50 = vld [vmem:[#allocation2 + $0x24] sm:$0xf]
    %v51 = vld [vmem:[#allocation2 + $0x28] sm:$0xf]
    %v52 = vld [vmem:[#allocation2 + $0x2c] sm:$0xf]
    %v53 = vld [vmem:[#allocation2 + $0x30] sm:$0xf]
    %v54 = vld [vmem:[#allocation2 + $0x34] sm:$0xf]
    %v55 = vld [vmem:[#allocation2 + $0x38] sm:$0xf]
    %v56 = vld [vmem:[#allocation2 + $0x3c] sm:$0xf]
    %v57 = vld [vmem:[#allocation5] sm:$0xf]
    %v58 = vld [vmem:[#allocation5 + $0x4] sm:$0xf]
    %v59 = vld [vmem:[#allocation5 + $0x8] sm:$0xf]
    %v60 = vld [vmem:[#allocation5 + $0xc] sm:$0xf]
    %v61 = vld [vmem:[#allocation5 + $0x10] sm:$0xf]
    %v62 = vld [vmem:[#allocation5 + $0x14] sm:$0xf]
    %v63 = vld [vmem:[#allocation5 + $0x18] sm:$0xf]
    %v64 = vld [vmem:[#allocation5 + $0x1c] sm:$0xf]
    %v65 = vld [vmem:[#allocation5 + $0x20] sm:$0xf]
    %v66 = vld [vmem:[#allocation5 + $0x24] sm:$0xf]
    %v67 = vld [vmem:[#allocation5 + $0x28] sm:$0xf]
    %v68 = vld [vmem:[#allocation5 + $0x2c] sm:$0xf]
    %v69 = vld [vmem:[#allocation5 + $0x30] sm:$0xf]
    %v70 = vld [vmem:[#allocation5 + $0x34] sm:$0xf]
    %v71 = vld [vmem:[#allocation5 + $0x38] sm:$0xf]
    %v72 = vld [vmem:[#allocation5 + $0x3c] sm:$0xf]
    %v89 = vunpack.c.l.b16 %v41
    %v90 = vunpack.c.l.b16 %v42
    %v91 = vunpack.c.l.b16 %v43
    %v92 = vunpack.c.l.b16 %v44
    %v93 = vunpack.c.l.b16 %v45
    %v94 = vunpack.c.l.b16 %v46
    %v95 = vunpack.c.l.b16 %v47
    %v96 = vunpack.c.l.b16 %v48
    %v97 = vunpack.c.l.b16 %v49
    %v98 = vunpack.c.l.b16 %v50
    %v99 = vunpack.c.l.b16 %v51
    %v100 = vunpack.c.l.b16 %v52
    %v101 = vunpack.c.l.b16 %v53
    %v102 = vunpack.c.l.b16 %v54
    %v103 = vunpack.c.l.b16 %v55
    %v104 = vunpack.c.l.b16 %v56
    %v105 = vpack.c.b16 %v90, %v89
    %v106 = vpack.c.b16 %v92, %v91
    %v107 = vpack.c.b16 %v94, %v93
    %v108 = vpack.c.b16 %v96, %v95
    %v109 = vpack.c.b16 %v98, %v97
    %v110 = vpack.c.b16 %v100, %v99
    %v111 = vpack.c.b16 %v102, %v101
    %v112 = vpack.c.b16 %v104, %v103
    %v137 = vunpack.c.l.b16 %v57
    %v138 = vunpack.c.l.b16 %v58
    %v139 = vunpack.c.l.b16 %v59
    %v140 = vunpack.c.l.b16 %v60
    %v141 = vunpack.c.l.b16 %v61
    %v142 = vunpack.c.l.b16 %v62
    %v143 = vunpack.c.l.b16 %v63
    %v144 = vunpack.c.l.b16 %v64
    %v145 = vunpack.c.l.b16 %v65
    %v146 = vunpack.c.l.b16 %v66
    %v147 = vunpack.c.l.b16 %v67
    %v148 = vunpack.c.l.b16 %v68
    %v149 = vunpack.c.l.b16 %v69
    %v150 = vunpack.c.l.b16 %v70
    %v151 = vunpack.c.l.b16 %v71
    %v152 = vunpack.c.l.b16 %v72
    %v153 = vpack.c.b16 %v138, %v137
    %v154 = vpack.c.b16 %v140, %v139
    %v155 = vpack.c.b16 %v142, %v141
    %v156 = vpack.c.b16 %v144, %v143
    %v157 = vpack.c.b16 %v146, %v145
    %v158 = vpack.c.b16 %v148, %v147
    %v159 = vpack.c.b16 %v150, %v149
    %v160 = vpack.c.b16 %v152, %v151
    %169 = vmatprep.subr.bf16.mxu0 0
    %170 = vmatpush1.bf16.msra.mxu0 %v153
    %171 = vmatprep.subr.bf16.mxu0 0
    %172 = vmatpush1.bf16.msra.mxu0 %v154
    %173 = vmatprep.subr.bf16.mxu0 0
    %174 = vmatpush1.bf16.msra.mxu0 %v155
    %175 = vmatprep.subr.bf16.mxu0 0
    %176 = vmatpush1.bf16.msra.mxu0 %v156
    %177 = vmatprep.subr.bf16.mxu0 0
    %178 = vmatpush1.bf16.msra.mxu0 %v157
    %179 = vmatprep.subr.bf16.mxu0 0
    %180 = vmatpush1.bf16.msra.mxu0 %v158
    %181 = vmatprep.subr.bf16.mxu0 0
    %182 = vmatpush1.bf16.msra.mxu0 %v159
    %183 = vmatprep.subr.bf16.mxu0 0
    %184 = vmatpush1.bf16.msra.mxu0 %v160
    %185 = vmatprep.subr.bf16.mxu0 0
    %186 = vmatpush1.bf16.msra.mxu0 0
    %187 = vmatprep.subr.bf16.mxu0 0
    %188 = vmatpush1.bf16.msra.mxu0 0
    %189 = vmatprep.subr.bf16.mxu0 0
    %190 = vmatpush1.bf16.msra.mxu0 0
    %191 = vmatprep.subr.bf16.mxu0 0
    %192 = vmatpush1.bf16.msra.mxu0 0
    %193 = vmatprep.subr.bf16.mxu0 0
    %194 = vmatpush1.bf16.msra.mxu0 0
    %195 = vmatprep.subr.bf16.mxu0 0
    %196 = vmatpush1.bf16.msra.mxu0 0
    %197 = vmatprep.subr.bf16.mxu0 0
    %198 = vmatpush1.bf16.msra.mxu0 0
    %199 = vmatprep.subr.bf16.mxu0 0
    %200 = vmatpush1.bf16.msra.mxu0 0
    %201 = vmatprep.mubr.bf16.mxu0 0
    %202 = vmatmul.mubr.bf16.gmra.mrb[0].mxu0 %v105
    %v203 = vpop.f32.mrb[0].mxu0
    %v204 = vadd.f32 0.0, %v203
    %v205 = vpop.f32.mrb[0].mxu0
    %v206 = vpop.f32.mrb[0].mxu0
    %v207 = vadd.f32 0.0, %v206
    %v208 = vpop.f32.mrb[0].mxu0
    %209 = vmatprep.mubr.bf16.mxu0 0
    %210 = vmatmul.mubr.bf16.gmra.mrb[0].mxu0 %v106
    %v211 = vpop.f32.mrb[0].mxu0
    %v212 = vadd.f32 0.0, %v211
    %v213 = vpop.f32.mrb[0].mxu0
    %v214 = vpop.f32.mrb[0].mxu0
    %v215 = vadd.f32 0.0, %v214
    %v216 = vpop.f32.mrb[0].mxu0
    %217 = vmatprep.mubr.bf16.mxu0 0
    %218 = vmatmul.mubr.bf16.gmra.mrb[0].mxu0 %v107
    %v219 = vpop.f32.mrb[0].mxu0
    %v220 = vadd.f32 0.0, %v219
    %v221 = vpop.f32.mrb[0].mxu0
    %v222 = vpop.f32.mrb[0].mxu0
    %v223 = vadd.f32 0.0, %v222
    %v224 = vpop.f32.mrb[0].mxu0
    %225 = vmatprep.mubr.bf16.mxu0 0
    %226 = vmatmul.mubr.bf16.gmra.mrb[0].mxu0 %v108
    %v227 = vpop.f32.mrb[0].mxu0
    %v228 = vadd.f32 0.0, %v227
    %v229 = vpop.f32.mrb[0].mxu0
    %v230 = vpop.f32.mrb[0].mxu0
    %v231 = vadd.f32 0.0, %v230
    %v232 = vpop.f32.mrb[0].mxu0
    %233 = vmatprep.mubr.bf16.mxu0 0
    %234 = vmatmul.mubr.bf16.gmra.mrb[0].mxu0 %v109
    %v235 = vpop.f32.mrb[0].mxu0
    %v236 = vadd.f32 0.0, %v235
    %v237 = vpop.f32.mrb[0].mxu0
    %v238 = vpop.f32.mrb[0].mxu0
    %v239 = vadd.f32 0.0, %v238
    %v240 = vpop.f32.mrb[0].mxu0
    %241 = vmatprep.mubr.bf16.mxu0 0
    %242 = vmatmul.mubr.bf16.gmra.mrb[0].mxu0 %v110
    %v243 = vpop.f32.mrb[0].mxu0
    %v244 = vadd.f32 0.0, %v243
    %v245 = vpop.f32.mrb[0].mxu0
    %v246 = vpop.f32.mrb[0].mxu0
    %v247 = vadd.f32 0.0, %v246
    %v248 = vpop.f32.mrb[0].mxu0
    %249 = vmatprep.mubr.bf16.mxu0 0
    %250 = vmatmul.mubr.bf16.gmra.mrb[0].mxu0 %v111
    %v251 = vpop.f32.mrb[0].mxu0
    %v252 = vadd.f32 0.0, %v251
    %v253 = vpop.f32.mrb[0].mxu0
    %v254 = vpop.f32.mrb[0].mxu0
    %v255 = vadd.f32 0.0, %v254
    %v256 = vpop.f32.mrb[0].mxu0
    %257 = vmatprep.mubr.bf16.mxu0 0
    %258 = vmatmul.mubr.bf16.gmra.mrb[0].mxu0 %v112
    %v259 = vpop.f32.mrb[0].mxu0
    %v260 = vadd.f32 0.0, %v259
    %v261 = vpop.f32.mrb[0].mxu0
    %v262 = vpop.f32.mrb[0].mxu0
    %v263 = vadd.f32 0.0, %v262
    %v264 = vpop.f32.mrb[0].mxu0
    %265 = vdwg.mxu0
    %v266 = vpack.c.bf16 %v207, %v204
    %v267 = vpack.c.bf16 %v215, %v212
    %v268 = vpack.c.bf16 %v223, %v220
    %v269 = vpack.c.bf16 %v231, %v228
    %v270 = vpack.c.bf16 %v239, %v236
    %v271 = vpack.c.bf16 %v247, %v244
    %v272 = vpack.c.bf16 %v255, %v252
    %v273 = vpack.c.bf16 %v263, %v260
    %v282 = vunpack.c.l.b16 %v266
    %v283 = vunpack.c.h.b16 %v266
    %v284 = vunpack.c.l.b16 %v267
    %v285 = vunpack.c.h.b16 %v267
    %v286 = vunpack.c.l.b16 %v268
    %v287 = vunpack.c.h.b16 %v268
    %v288 = vunpack.c.l.b16 %v269
    %v289 = vunpack.c.h.b16 %v269
    %v290 = vunpack.c.l.b16 %v270
    %v291 = vunpack.c.h.b16 %v270
    %v292 = vunpack.c.l.b16 %v271
    %v293 = vunpack.c.h.b16 %v271
    %v294 = vunpack.c.l.b16 %v272
    %v295 = vunpack.c.h.b16 %v272
    %v296 = vunpack.c.l.b16 %v273
    %v297 = vunpack.c.h.b16 %v273
    %v298 = vpack.c.b16 %v282, %v282
    %v299 = vpack.c.b16 %v283, %v283
    %v300 = vpack.c.b16 %v284, %v284
    %v301 = vpack.c.b16 %v285, %v285
    %v302 = vpack.c.b16 %v286, %v286
    %v303 = vpack.c.b16 %v287, %v287
    %v304 = vpack.c.b16 %v288, %v288
    %v305 = vpack.c.b16 %v289, %v289
    %v306 = vpack.c.b16 %v290, %v290
    %v307 = vpack.c.b16 %v291, %v291
    %v308 = vpack.c.b16 %v292, %v292
    %v309 = vpack.c.b16 %v293, %v293
    %v310 = vpack.c.b16 %v294, %v294
    %v311 = vpack.c.b16 %v295, %v295
    %v312 = vpack.c.b16 %v296, %v296
    %v313 = vpack.c.b16 %v297, %v297
    %330 = vst [vmem:[#allocation7] sm:$0xf] %v298
    %331 = vst [vmem:[#allocation7 + $0x4] sm:$0xf] %v299
    %332 = vst [vmem:[#allocation7 + $0x8] sm:$0xf] %v300
    %333 = vst [vmem:[#allocation7 + $0xc] sm:$0xf] %v301
    %334 = vst [vmem:[#allocation7 + $0x10] sm:$0xf] %v302
    %335 = vst [vmem:[#allocation7 + $0x14] sm:$0xf] %v303
    %336 = vst [vmem:[#allocation7 + $0x18] sm:$0xf] %v304
    %337 = vst [vmem:[#allocation7 + $0x1c] sm:$0xf] %v305
    %338 = vst [vmem:[#allocation7 + $0x20] sm:$0xf] %v306
    %339 = vst [vmem:[#allocation7 + $0x24] sm:$0xf] %v307
    %340 = vst [vmem:[#allocation7 + $0x28] sm:$0xf] %v308
    %341 = vst [vmem:[#allocation7 + $0x2c] sm:$0xf] %v309
    %342 = vst [vmem:[#allocation7 + $0x30] sm:$0xf] %v310
    %343 = vst [vmem:[#allocation7 + $0x34] sm:$0xf] %v311
    %344 = vst [vmem:[#allocation7 + $0x38] sm:$0xf] %v312
    %345 = vst [vmem:[#allocation7 + $0x3c] sm:$0xf] %v313
    // Predicated region
    $region18: #{tpu_custom_call.1} parent=1 // pred_check
      _
    $region19: #{tpu_custom_call.1} parent=1 // pred_check_branch
      %347 = sbr.rel (0) target = $region21
    $region20: #{tpu_custom_call.1} parent=1 // pred_region
      %s349 = ssub.s32 1024, 1024
      %350 = vsyncadd [#allocation4], %s349
      %s351 = sshll.u32 [#allocation7], 4
      %s352 = int_to_ptr.vmem [resolvable:$true] %s351
      %357 = dma.vmem_to_hbm [thread:$0]  %s352, 1024, %s2, [#allocation4], 64, 64, 4
    $region21: #{tpu_custom_call.1} parent=1 // pred_fallthru
      _
    // Predicated region
    $region22: #{tpu_custom_call.1} parent=1 // pred_check
      _
    $region23: #{tpu_custom_call.1} parent=1 // pred_check_branch
      %359 = sbr.rel (0) target = $region25
    $region24: #{tpu_custom_call.1} parent=1 // pred_region
      %360 = dma.done [#allocation4], 1024
    $region25: #{tpu_custom_call.1} parent=1 // pred_fallthru
      _
    %361 = vsyncpa [#allocation3], 1
    %362 = vsyncpa [#allocation6], 1
    %363 = vsyncpa [#allocation4], 1

</llo_original>
